<compile_context>
chip_gen: v5e
topology: v5e:2x2
jax: 0.10.0
libtpu: 0.0.40
codegen_flags: <defaults>
</compile_context>

<pallas_src>
import functools

import jax
import jax.numpy as jnp
from jax.experimental import pallas as pl
from jax.experimental.pallas import tpu as pltpu


def valuenet_kernel(xT_ref, w1_ref, b1_ref, w2_ref, b2_ref, o_ref):
    # xT: [S, TILE_B]   w1: [H, S]   b1: [H, 1]   w2: [1, H]   b2: [1, 1] (SMEM)
    # o : [1, TILE_B]
    h = jnp.dot(w1_ref[...], xT_ref[...],
                preferred_element_type=jnp.float32)              # MXU: [H, TILE_B]
    h = jnp.maximum(h + b1_ref[...], 0.0)                        # VPU (bias + ReLU)
    y = jnp.dot(w2_ref[...], h,
                preferred_element_type=jnp.float32)              # MXU: [1, TILE_B]
    o_ref[...] = (y + b2_ref[0, 0]).astype(o_ref.dtype)          # lane-dense store


@functools.partial(jax.jit, static_argnames=("tile_b",))
def value_net_forward(x, w1, b1, w2, b2, *, tile_b=256):
    """x: [B, S] f32; w1: [H, S]; b1: [H]; w2: [1, H]; b2: [1]  ->  [B, 1]."""
    B, S = x.shape
    H = w1.shape[0]
    nb = pl.cdiv(B, tile_b)
    B_pad = nb * tile_b

    # Batch on the lane axis, padded to a multiple of the tile.
    xT = jnp.pad(x.T, ((0, 0), (0, B_pad - B)))                  # [S, B_pad]
    b1c = b1.reshape(H, 1)                                       # sublane-broadcast column
    b2s = b2.reshape(1, 1)                                       # SMEM scalar

    flops = 2 * B_pad * H * S + 2 * B_pad * H + 2 * B_pad
    bytes_accessed = 4 * (S * B_pad + H * S + 2 * H + 1 + B_pad)

    out = pl.pallas_call(
        valuenet_kernel,
        out_shape=jax.ShapeDtypeStruct((1, B_pad), jnp.float32),
        grid=(nb,),
        in_specs=[
            # x tile streams over the grid; weights stay resident (constant index maps).
            pl.BlockSpec((S, tile_b), lambda i: (0, i),
                         memory_space=pltpu.MemorySpace.VMEM),
            pl.BlockSpec((H, S), lambda i: (0, 0),
                         memory_space=pltpu.MemorySpace.VMEM),
            pl.BlockSpec((H, 1), lambda i: (0, 0),
                         memory_space=pltpu.MemorySpace.VMEM),
            pl.BlockSpec((1, H), lambda i: (0, 0),
                         memory_space=pltpu.MemorySpace.VMEM),
            pl.BlockSpec(memory_space=pltpu.MemorySpace.SMEM),   # b2 scalar
        ],
        out_specs=pl.BlockSpec((1, tile_b), lambda i: (0, i),
                               memory_space=pltpu.MemorySpace.VMEM),
        compiler_params=pltpu.CompilerParams(
            dimension_semantics=("parallel",)),
        cost_estimate=pl.CostEstimate(flops=flops, transcendentals=0,
                                      bytes_accessed=bytes_accessed),
    )(xT, w1, b1c, w2, b2s)

    return out[0, :B].reshape(B, 1)


def init_params(key, state_dim, hidden_dim):
    """PyTorch-default Linear init (uniform +/- 1/sqrt(fan_in)), native layouts:
    fc1.weight [H, S], fc1.bias [H], fc2.weight [1, H], fc2.bias [1]."""
    k1, k2, k3, k4 = jax.random.split(key, 4)
    bound1 = 1.0 / jnp.sqrt(jnp.float32(state_dim))
    bound2 = 1.0 / jnp.sqrt(jnp.float32(hidden_dim))
    w1 = jax.random.uniform(k1, (hidden_dim, state_dim), jnp.float32, -bound1, bound1)
    b1 = jax.random.uniform(k2, (hidden_dim,), jnp.float32, -bound1, bound1)
    w2 = jax.random.uniform(k3, (1, hidden_dim), jnp.float32, -bound2, bound2)
    b2 = jax.random.uniform(k4, (1,), jnp.float32, -bound2, bound2)
    return w1, b1, w2, b2


if __name__ == "__main__":
    state_dim = 4        # CartPole-v1 observation dim
    hidden_dim = 128
    batch = 32           # small demo batch; padded to one 128-lane tile inside the wrapper

    key = jax.random.PRNGKey(0)
    kx, kp = jax.random.split(key)
    x = jax.random.normal(kx, (batch, state_dim), dtype=jnp.float32)
    w1, b1, w2, b2 = init_params(kp, state_dim, hidden_dim)

    out = value_net_forward(x, w1, b1, w2, b2, tile_b=128)
    out = jax.block_until_ready(out)

    # Pure-JAX reference of the same math: relu(x @ W1^T + b1) @ W2^T + b2.
    ref = jnp.maximum(x @ w1.T + b1, 0.0) @ w2.T + b2
    assert out.shape == (batch, 1)
    assert jnp.allclose(out, ref, atol=1e-4, rtol=1e-4), float(jnp.max(jnp.abs(out - ref)))

    print("KERNEL_OK")
</pallas_src>

<mosaic_0001>
module attributes {stable_mosaic.version = 11 : i64} {
  func.func @valuenet_kernel(%arg0: i32, %arg1: memref<4x128xf32, #tpu.memory_space<vmem>>, %arg2: memref<128x4xf32, #tpu.memory_space<vmem>>, %arg3: memref<128x1xf32, #tpu.memory_space<vmem>>, %arg4: memref<1x128xf32, #tpu.memory_space<vmem>>, %arg5: memref<1x1xf32, #tpu.memory_space<smem>>, %arg6: memref<1x128xf32, #tpu.memory_space<vmem>>) attributes {dimension_semantics = [#tpu.dimension_semantics<parallel>], iteration_bounds = array<i64: 1>, scalar_prefetch = 0 : i64, scratch_operands = 0 : i64, tpu.core_type = #tpu.core_type<tc>, window_params = [{transform_indices = @transform_0, window_bounds = array<i64: 4, 128>}, {pipeline_mode = #tpu.pipeline_mode<synchronous>, transform_indices = @transform_1, window_bounds = array<i64: 128, 4>}, {pipeline_mode = #tpu.pipeline_mode<synchronous>, transform_indices = @transform_2, window_bounds = array<i64: 128, 1>}, {pipeline_mode = #tpu.pipeline_mode<synchronous>, transform_indices = @transform_3, window_bounds = array<i64: 1, 128>}, {transform_indices = @transform_4, window_bounds = array<i64: 1, 1>}, {transform_indices = @transform_5, window_bounds = array<i64: 1, 128>}]} {
    %c0 = arith.constant 0 : index
    %c0_0 = arith.constant 0 : index
    %0 = vector.load %arg2[%c0, %c0_0] : memref<128x4xf32, #tpu.memory_space<vmem>>, vector<128x4xf32>
    %c0_1 = arith.constant 0 : index
    %c0_2 = arith.constant 0 : index
    %1 = vector.load %arg1[%c0_1, %c0_2] : memref<4x128xf32, #tpu.memory_space<vmem>>, vector<4x128xf32>
    %cst = arith.constant dense<0.000000e+00> : vector<128x128xf32>
    %2 = tpu.matmul %0, %1, %cst {dimension_numbers = #tpu.dot_dimension_numbers<[1], [0], [0], [1], [0, 0, 1, 1], [], []>} : vector<128x4xf32>, vector<4x128xf32>, vector<128x128xf32> -> vector<128x128xf32>
    %c0_3 = arith.constant 0 : index
    %c0_4 = arith.constant 0 : index
    %3 = vector.load %arg3[%c0_3, %c0_4] : memref<128x1xf32, #tpu.memory_space<vmem>>, vector<128x1xf32>
    %4 = vector.broadcast %3 : vector<128x1xf32> to vector<128x128xf32>
    %5 = arith.addf %2, %4 : vector<128x128xf32>
    %cst_5 = arith.constant 0.000000e+00 : f32
    %6 = vector.broadcast %cst_5 : f32 to vector<128x128xf32>
    %7 = arith.maximumf %5, %6 : vector<128x128xf32>
    %c0_6 = arith.constant 0 : index
    %c0_7 = arith.constant 0 : index
    %8 = vector.load %arg4[%c0_6, %c0_7] : memref<1x128xf32, #tpu.memory_space<vmem>>, vector<1x128xf32>
    %cst_8 = arith.constant dense<0.000000e+00> : vector<1x128xf32>
    %9 = tpu.matmul %8, %7, %cst_8 {dimension_numbers = #tpu.dot_dimension_numbers<[1], [0], [0], [1], [0, 0, 1, 1], [], []>} : vector<1x128xf32>, vector<128x128xf32>, vector<1x128xf32> -> vector<1x128xf32>
    %c0_9 = arith.constant 0 : index
    %c0_10 = arith.constant 0 : index
    %10 = memref.load %arg5[%c0_9, %c0_10] : memref<1x1xf32, #tpu.memory_space<smem>>
    %11 = vector.broadcast %10 : f32 to vector<1x128xf32>
    %12 = arith.addf %9, %11 : vector<1x128xf32>
    %c0_11 = arith.constant 0 : index
    %c0_12 = arith.constant 0 : index
    %13 = vector.load %arg6[%c0_11, %c0_12] : memref<1x128xf32, #tpu.memory_space<vmem>>, vector<1x128xf32>
    tpu.vector_store %arg6[%c0_11, %c0_12], %12 {strides = array<i32>} : memref<1x128xf32, #tpu.memory_space<vmem>>, vector<1x128xf32>,
    return
  }
  func.func @transform_0(%arg0: i32) -> (i32, i32) {
    %c0_i32 = arith.constant 0 : i32
    %c0_i32_0 = arith.constant 0 : i32
    return %c0_i32, %arg0 : i32, i32
  }
  func.func @transform_1(%arg0: i32) -> (i32, i32) {
    %c0_i32 = arith.constant 0 : i32
    %c0_i32_0 = arith.constant 0 : i32
    %c0_i32_1 = arith.constant 0 : i32
    return %c0_i32, %c0_i32_0 : i32, i32
  }
  func.func @transform_2(%arg0: i32) -> (i32, i32) {
    %c0_i32 = arith.constant 0 : i32
    %c0_i32_0 = arith.constant 0 : i32
    %c0_i32_1 = arith.constant 0 : i32
    return %c0_i32, %c0_i32_0 : i32, i32
  }
  func.func @transform_3(%arg0: i32) -> (i32, i32) {
    %c0_i32 = arith.constant 0 : i32
    %c0_i32_0 = arith.constant 0 : i32
    %c0_i32_1 = arith.constant 0 : i32
    return %c0_i32, %c0_i32_0 : i32, i32
  }
  func.func @transform_4(%arg0: i32) -> (i32, i32) {
    %c0_i32 = arith.constant 0 : i32
    %c0_i32_0 = arith.constant 0 : i32
    %c0_i32_1 = arith.constant 0 : i32
    return %c0_i32, %c0_i32_0 : i32, i32
  }
  func.func @transform_5(%arg0: i32) -> (i32, i32) {
    %c0_i32 = arith.constant 0 : i32
    %c0_i32_0 = arith.constant 0 : i32
    return %c0_i32, %arg0 : i32, i32
  }
}

</mosaic_0001>

<llo_original>
// kernel: value_net_forward.1
$region0: #{value_net_forward.1}
  #allocation0 [shape = 'u32[]', space=smem, size = 0x4, offset = 0x4, fixed_abs, tag = 'smem constant byte address 0x4 - core index']
  #allocation1 [shape = 'u32[72,128]{1,0:T(1,128)}', space=vmem, size = 0x9000, scoped, tag = 'internal scratch']
  #allocation2 [shape = 'f32[1,1]{1,0:T(1,128)S(6)}', space=smem, size = 0x200, scoped, tag = 'scoped memory for value_net_forward.1']
  %s0 = inlined_call_operand.vmem [shape: f32[4,128], index: 0, kind: input, shape index: {}]
  %s1 = inlined_call_operand.vmem [shape: f32[128,4], index: 1, kind: input, shape index: {}]
  %s2 = inlined_call_operand.vmem [shape: f32[128,1], index: 2, kind: input, shape index: {}]
  %s3 = inlined_call_operand.vmem [shape: f32[1,128], index: 3, kind: input, shape index: {}]
  %s4 = inlined_call_operand.<no memory space> [shape: f32[1,1], index: 4, kind: input, shape index: {}]
  %s5 = inlined_call_operand.vmem [shape: f32[1,128], index: 5, kind: output, shape index: {}]
  %s6 = sld [smem:[#allocation0]]
  $region30: #{value_net_forward.1} parent=0
    _
  %s8 = ssub.s32 1, %s6
  %s9 = scalar_select 0, %s8, %s6
  %10 = sst [smem:[#allocation2]] %s4
  // Predicated region
  $region2: #{value_net_forward.1} parent=0 // pred_check
    _
  $region3: #{value_net_forward.1} parent=0 // pred_check_branch
    %12 = sbr.rel (0) target = $region5
  $region4: #{value_net_forward.1} parent=0 // pred_region
    _
  $region5: #{value_net_forward.1} parent=0 // pred_fallthru
    _
  // Predicated region
  $region6: #{value_net_forward.1} parent=0 // pred_check
    _
  $region7: #{value_net_forward.1} parent=0 // pred_check_branch
    %14 = sbr.rel (0) target = $region9
  $region8: #{value_net_forward.1} parent=0 // pred_region
    _
  $region9: #{value_net_forward.1} parent=0 // pred_fallthru
    _
  // Predicated region
  $region10: #{value_net_forward.1} parent=0 // pred_check
    _
  $region11: #{value_net_forward.1} parent=0 // pred_check_branch
    %16 = sbr.rel (0) target = $region13
  $region12: #{value_net_forward.1} parent=0 // pred_region
    _
  $region13: #{value_net_forward.1} parent=0 // pred_fallthru
    _
  // Predicated region
  $region14: #{value_net_forward.1} parent=0 // pred_check
    _
  $region15: #{value_net_forward.1} parent=0 // pred_check_branch
    %18 = sbr.rel (0) target = $region17
  $region16: #{value_net_forward.1} parent=0 // pred_region
    _
  $region17: #{value_net_forward.1} parent=0 // pred_fallthru
    _
  // Predicated region
  $region18: #{value_net_forward.1} parent=0 // pred_check
    _
  $region19: #{value_net_forward.1} parent=0 // pred_check_branch
    %20 = sbr.rel (0) target = $region21
  $region20: #{value_net_forward.1} parent=0 // pred_region
    _
  $region21: #{value_net_forward.1} parent=0 // pred_fallthru
    _
  %v21 = vld [vmem:[%s1] sm:$0xff]
  %v22 = vld [vmem:[%s1 + $0x8] sm:$0xff]
  %v23 = vld [vmem:[%s1 + $0x10] sm:$0xff]
  %v24 = vld [vmem:[%s1 + $0x18] sm:$0xff]
  %v25 = vld [vmem:[%s1 + $0x20] sm:$0xff]
  %v26 = vld [vmem:[%s1 + $0x28] sm:$0xff]
  %v27 = vld [vmem:[%s1 + $0x30] sm:$0xff]
  %v28 = vld [vmem:[%s1 + $0x38] sm:$0xff]
  %v29 = vld [vmem:[%s1 + $0x40] sm:$0xff]
  %v30 = vld [vmem:[%s1 + $0x48] sm:$0xff]
  %v31 = vld [vmem:[%s1 + $0x50] sm:$0xff]
  %v32 = vld [vmem:[%s1 + $0x58] sm:$0xff]
  %v33 = vld [vmem:[%s1 + $0x60] sm:$0xff]
  %v34 = vld [vmem:[%s1 + $0x68] sm:$0xff]
  %v35 = vld [vmem:[%s1 + $0x70] sm:$0xff]
  %v36 = vld [vmem:[%s1 + $0x78] sm:$0xff]
  %v37 = vld [vmem:[%s0] sm:$0xf]
  %v38 = vld [vmem:[%s2] sm:$0xff]
  %v39 = vld [vmem:[%s2 + $0x8] sm:$0xff]
  %v40 = vld [vmem:[%s2 + $0x10] sm:$0xff]
  %v41 = vld [vmem:[%s2 + $0x18] sm:$0xff]
  %v42 = vld [vmem:[%s2 + $0x20] sm:$0xff]
  %v43 = vld [vmem:[%s2 + $0x28] sm:$0xff]
  %v44 = vld [vmem:[%s2 + $0x30] sm:$0xff]
  %v45 = vld [vmem:[%s2 + $0x38] sm:$0xff]
  %v46 = vld [vmem:[%s2 + $0x40] sm:$0xff]
  %v47 = vld [vmem:[%s2 + $0x48] sm:$0xff]
  %v48 = vld [vmem:[%s2 + $0x50] sm:$0xff]
  %v49 = vld [vmem:[%s2 + $0x58] sm:$0xff]
  %v50 = vld [vmem:[%s2 + $0x60] sm:$0xff]
  %v51 = vld [vmem:[%s2 + $0x68] sm:$0xff]
  %v52 = vld [vmem:[%s2 + $0x70] sm:$0xff]
  %v53 = vld [vmem:[%s2 + $0x78] sm:$0xff]
  %55 = vset.pattern.permute.xlu0 0
  %56 = vperm.xlu0 %55, %v38
  %v57 = vpop.permute.xlu0 %56
  %60 = vset.pattern.permute.xlu0 0
  %61 = vperm.xlu0 %60, %v39
  %v62 = vpop.permute.xlu0 %61
  %65 = vset.pattern.permute.xlu0 0
  %66 = vperm.xlu0 %65, %v40
  %v67 = vpop.permute.xlu0 %66
  %70 = vset.pattern.permute.xlu0 0
  %71 = vperm.xlu0 %70, %v41
  %v72 = vpop.permute.xlu0 %71
  %75 = vset.pattern.permute.xlu0 0
  %76 = vperm.xlu0 %75, %v42
  %v77 = vpop.permute.xlu0 %76
  %80 = vset.pattern.permute.xlu0 0
  %81 = vperm.xlu0 %80, %v43
  %v82 = vpop.permute.xlu0 %81
  %85 = vset.pattern.permute.xlu0 0
  %86 = vperm.xlu0 %85, %v44
  %v87 = vpop.permute.xlu0 %86
  %90 = vset.pattern.permute.xlu0 0
  %91 = vperm.xlu0 %90, %v45
  %v92 = vpop.permute.xlu0 %91
  %95 = vset.pattern.permute.xlu0 0
  %96 = vperm.xlu0 %95, %v46
  %v97 = vpop.permute.xlu0 %96
  %100 = vset.pattern.permute.xlu0 0
  %101 = vperm.xlu0 %100, %v47
  %v102 = vpop.permute.xlu0 %101
  %105 = vset.pattern.permute.xlu0 0
  %106 = vperm.xlu0 %105, %v48
  %v107 = vpop.permute.xlu0 %106
  %110 = vset.pattern.permute.xlu0 0
  %111 = vperm.xlu0 %110, %v49
  %v112 = vpop.permute.xlu0 %111
  %115 = vset.pattern.permute.xlu0 0
  %116 = vperm.xlu0 %115, %v50
  %v117 = vpop.permute.xlu0 %116
  %120 = vset.pattern.permute.xlu0 0
  %121 = vperm.xlu0 %120, %v51
  %v122 = vpop.permute.xlu0 %121
  %125 = vset.pattern.permute.xlu0 0
  %126 = vperm.xlu0 %125, %v52
  %v127 = vpop.permute.xlu0 %126
  %130 = vset.pattern.permute.xlu0 0
  %131 = vperm.xlu0 %130, %v53
  %v132 = vpop.permute.xlu0 %131
  %vm134 = vcmask 31744
  %v136 = vsel %vm134, %v21, 0
  %v139 = vsel %vm134, %v22, 0
  %v142 = vsel %vm134, %v23, 0
  %v145 = vsel %vm134, %v24, 0
  %v148 = vsel %vm134, %v25, 0
  %v151 = vsel %vm134, %v26, 0
  %v154 = vsel %vm134, %v27, 0
  %v157 = vsel %vm134, %v28, 0
  %v160 = vsel %vm134, %v29, 0
  %v163 = vsel %vm134, %v30, 0
  %v166 = vsel %vm134, %v31, 0
  %v169 = vsel %vm134, %v32, 0
  %v172 = vsel %vm134, %v33, 0
  %v175 = vsel %vm134, %v34, 0
  %v178 = vsel %vm134, %v35, 0
  %v181 = vsel %vm134, %v36, 0
  %vm183 = vcmask 1043456
  %v185 = vsel %vm183, %v37, 0
  %187 = vmatpush.msra.mxu0 0.0
  %188 = vmatpush.msra.mxu0 0.0
  %189 = vmatpush.msra.mxu0 0.0
  %190 = vmatpush.msra.mxu0 0.0
  %191 = vmatpush.msra.mxu0 0.0
  %192 = vmatpush.msra.mxu0 0.0
  %193 = vmatpush.msra.mxu0 0.0
  %194 = vmatpush.msra.mxu0 0.0
  %195 = vmatpush.msra.mxu0 0.0
  %196 = vmatpush.msra.mxu0 0.0
  %197 = vmatpush.msra.mxu0 0.0
  %198 = vmatpush.msra.mxu0 0.0
  %199 = vmatpush.msra.mxu0 0.0
  %200 = vmatpush.msra.mxu0 0.0
  %201 = vmatpush.msra.mxu0 0.0
  %202 = vmatpush.msra.mxu0 %v185
  %203 = vmatmul.f32.gmra.mxu0 %v136
  %v204 = vpop.f32.mrf.mxu0
  %v205 = vadd.f32 %v57, %v204
  %206 = vmatmul.f32.gmra.mxu0 %v139
  %v207 = vpop.f32.mrf.mxu0
  %v208 = vadd.f32 %v62, %v207
  %209 = vmatmul.f32.gmra.mxu0 %v142
  %v210 = vpop.f32.mrf.mxu0
  %v211 = vadd.f32 %v67, %v210
  %212 = vmatmul.f32.gmra.mxu0 %v145
  %v213 = vpop.f32.mrf.mxu0
  %v214 = vadd.f32 %v72, %v213
  %215 = vmatmul.f32.gmra.mxu0 %v148
  %v216 = vpop.f32.mrf.mxu0
  %v217 = vadd.f32 %v77, %v216
  %218 = vmatmul.f32.gmra.mxu0 %v151
  %v219 = vpop.f32.mrf.mxu0
  %v220 = vadd.f32 %v82, %v219
  %221 = vmatmul.f32.gmra.mxu0 %v154
  %v222 = vpop.f32.mrf.mxu0
  %v223 = vadd.f32 %v87, %v222
  %224 = vmatmul.f32.gmra.mxu0 %v157
  %v225 = vpop.f32.mrf.mxu0
  %v226 = vadd.f32 %v92, %v225
  %227 = vmatmul.f32.gmra.mxu0 %v160
  %v228 = vpop.f32.mrf.mxu0
  %v229 = vadd.f32 %v97, %v228
  %230 = vmatmul.f32.gmra.mxu0 %v163
  %v231 = vpop.f32.mrf.mxu0
  %v232 = vadd.f32 %v102, %v231
  %233 = vmatmul.f32.gmra.mxu0 %v166
  %v234 = vpop.f32.mrf.mxu0
  %v235 = vadd.f32 %v107, %v234
  %236 = vmatmul.f32.gmra.mxu0 %v169
  %v237 = vpop.f32.mrf.mxu0
  %v238 = vadd.f32 %v112, %v237
  %239 = vmatmul.f32.gmra.mxu0 %v172
  %v240 = vpop.f32.mrf.mxu0
  %v241 = vadd.f32 %v117, %v240
  %242 = vmatmul.f32.gmra.mxu0 %v175
  %v243 = vpop.f32.mrf.mxu0
  %v244 = vadd.f32 %v122, %v243
  %245 = vmatmul.f32.gmra.mxu0 %v178
  %v246 = vpop.f32.mrf.mxu0
  %v247 = vadd.f32 %v127, %v246
  %248 = vmatmul.f32.gmra.mxu0 %v181
  %v249 = vpop.f32.mrf.mxu0
  %v250 = vadd.f32 %v132, %v249
  %251 = vdwg.mxu0
  %v252 = vmax.f32 %v205, 0.0
  %v253 = vmax.f32 %v208, 0.0
  %v254 = vmax.f32 %v211, 0.0
  %v255 = vmax.f32 %v214, 0.0
  %v256 = vmax.f32 %v217, 0.0
  %v257 = vmax.f32 %v220, 0.0
  %v258 = vmax.f32 %v223, 0.0
  %v259 = vmax.f32 %v226, 0.0
  %v260 = vmax.f32 %v229, 0.0
  %v261 = vmax.f32 %v232, 0.0
  %v262 = vmax.f32 %v235, 0.0
  %v263 = vmax.f32 %v238, 0.0
  %v264 = vmax.f32 %v241, 0.0
  %v265 = vmax.f32 %v244, 0.0
  %v266 = vmax.f32 %v247, 0.0
  %v267 = vmax.f32 %v250, 0.0
  %v268 = vld [vmem:[%s3] sm:$0x1]
  %s269 = sld [smem:[#allocation2]]
  %v270 = vstv %s269
  %271 = vmatpush.msra.mxu0 %v267
  %272 = vmatpush.msra.mxu0 %v266
  %273 = vmatpush.msra.mxu0 %v265
  %274 = vmatpush.msra.mxu0 %v264
  %275 = vmatpush.msra.mxu0 %v263
  %276 = vmatpush.msra.mxu0 %v262
  %277 = vmatpush.msra.mxu0 %v261
  %278 = vmatpush.msra.mxu0 %v260
  %279 = vmatpush.msra.mxu0 %v259
  %280 = vmatpush.msra.mxu0 %v258
  %281 = vmatpush.msra.mxu0 %v257
  %282 = vmatpush.msra.mxu0 %v256
  %283 = vmatpush.msra.mxu0 %v255
  %284 = vmatpush.msra.mxu0 %v254
  %285 = vmatpush.msra.mxu0 %v253
  %286 = vmatpush.msra.mxu0 %v252
  %287 = vmatmul.f32.gmra.mxu0 %v268
  %v288 = vpop.f32.mrf.mxu0
  %v289 = vadd.f32 %v270, %v288
  %290 = vdwg.mxu0
  %291 = vst [vmem:[%s5] sm:$0x1] %v289
  // Predicated region
  $region22: #{value_net_forward.1} parent=0 // pred_check
    _
  $region23: #{value_net_forward.1} parent=0 // pred_check_branch
    %293 = sbr.rel (0) target = $region25
  $region24: #{value_net_forward.1} parent=0 // pred_region
    _
  $region25: #{value_net_forward.1} parent=0 // pred_fallthru
    _
  // Predicated region
  $region26: #{value_net_forward.1} parent=0 // pred_check
    _
  $region27: #{value_net_forward.1} parent=0 // pred_check_branch
    %295 = sbr.rel (0) target = $region29
  $region28: #{value_net_forward.1} parent=0 // pred_region
    _
  $region29: #{value_net_forward.1} parent=0 // pred_fallthru
    _

</llo_original>
